<compile_context>
chip_gen: v6e
topology: v6e:2x2x1
jax: 0.10.0
libtpu: 0.0.40
codegen_flags: <defaults>
</compile_context>

<pallas_src>
import functools
import math

import jax
import jax.numpy as jnp
from jax.experimental import pallas as pl
from jax.experimental.pallas import tpu as pltpu

TM, TN = 256, 256            # MXU-shaped output tile (v6e/v7x 2x256x256; also fine on v5e)
K_SINGLE = 2048              # K at or below this -> single k-step (block == full K)
VMEM_LIMIT = 48 * 1024 * 1024
LAYERS = [(3, 64, 1), (4, 128, 2), (6, 256, 2), (3, 512, 2)]  # resnet50 config


def _round_up(x, m):
    return ((x + m - 1) // m) * m


def _pick_tk(K):
    """Reduction tile: full K when small, else a 128-multiple divisor of K."""
    if K <= K_SINGLE:
        return K
    for t in (512, 256, 128):
        if K % t == 0:
            return t
    return None


# ----------------------------- Pallas kernels -----------------------------

def _mm_bn_kernel(a_ref, b_ref, s_ref, c_ref, o_ref, acc_ref, *, relu):
    """acc += A @ B ; on last k-step: out = act(acc * scale + bias)."""
    @pl.when(pl.program_id(2) == 0)
    def _():
        acc_ref[...] = jnp.zeros_like(acc_ref)

    acc_ref[...] += jnp.dot(a_ref[...], b_ref[...],
                            preferred_element_type=jnp.float32)

    @pl.when(pl.program_id(2) == pl.num_programs(2) - 1)
    def _():
        r = acc_ref[...] * s_ref[...] + c_ref[...]
        if relu:
            r = jnp.maximum(r, 0.0)
        o_ref[...] = r.astype(o_ref.dtype)


def _mm_bias_kernel(a_ref, b_ref, c_ref, o_ref, acc_ref, *, relu):
    """acc += A @ B ; on last k-step: out = act(acc + bias) (no scale stream)."""
    @pl.when(pl.program_id(2) == 0)
    def _():
        acc_ref[...] = jnp.zeros_like(acc_ref)

    acc_ref[...] += jnp.dot(a_ref[...], b_ref[...],
                            preferred_element_type=jnp.float32)

    @pl.when(pl.program_id(2) == pl.num_programs(2) - 1)
    def _():
        r = acc_ref[...] + c_ref[...]
        if relu:
            r = jnp.maximum(r, 0.0)
        o_ref[...] = r.astype(o_ref.dtype)


def _normalize_kernel(x_ref, m_ref, inv_ref, o_ref):
    o_ref[...] = (x_ref[...] - m_ref[...]) * inv_ref[...]


def _add_relu_kernel(a_ref, b_ref, o_ref):
    o_ref[...] = jnp.maximum(a_ref[...] + b_ref[...], 0.0)


def _maxpool_kernel(p00_ref, p01_ref, p10_ref, p11_ref, o_ref, *, oh, ow):
    # 3x3 / stride-2 max pool: tap (i, j) is a contiguous slice of phase (i%2, j%2).
    phase = {(0, 0): p00_ref, (0, 1): p01_ref, (1, 0): p10_ref, (1, 1): p11_ref}
    r = None
    for i in range(3):
        for j in range(3):
            ref = phase[(i % 2, j % 2)]
            di, dj = i // 2, j // 2
            v = ref[:, di:di + oh, dj:dj + ow, :]
            r = v if r is None else jnp.maximum(r, v)
    o_ref[...] = r


def _avgpool_kernel(x_ref, o_ref, *, inv_s):
    # x block: (1, S, C); mean over spatial axis S.
    o_ref[...] = jnp.sum(x_ref[...], axis=1) * inv_s


# ----------------------------- fused matmul wrapper -----------------------------

def matmul_fused(a, b, scale, bias, relu):
    """out = act((a @ b) [* scale] + bias); scale/bias are per output column.

    bf16 operands on the MXU, f32 accumulator in VMEM scratch. No wrapper-side
    padding: ragged M/N edges are partial blocks (their garbage never reaches a
    valid output element) and tk always divides K exactly.
    """
    M, K = a.shape
    K2, N = b.shape
    assert K == K2
    a = a.astype(jnp.bfloat16)
    b = b.astype(jnp.bfloat16)

    tk = _pick_tk(K)
    if tk is None:  # ragged deep-K fallback (never hit by ResNet-50 shapes)
        Kp = _round_up(K, 128)
        a = jnp.pad(a, ((0, 0), (0, Kp - K)))
        b = jnp.pad(b, ((0, Kp - K), (0, 0)))
        K = Kp
        tk = 512 if K % 512 == 0 else (256 if K % 256 == 0 else 128)

    tm = TM if M >= TM else M
    tn = TN if N >= TN else N
    ksteps = K // tk

    a_spec = pl.BlockSpec((tm, tk), lambda i, j, k: (i, k))
    b_spec = pl.BlockSpec((tk, tn), lambda i, j, k: (k, j))
    if ksteps >= 4:
        # Deeper weight pipelining hides B-tile DMA under MXU work on long-K convs.
        try:
            b_spec = pl.BlockSpec((tk, tn), lambda i, j, k: (k, j),
                                  pipeline_mode=pl.Buffered(3))
        except Exception:  # older BlockSpec signature: keep default double-buffering
            b_spec = pl.BlockSpec((tk, tn), lambda i, j, k: (k, j))
    col_spec = pl.BlockSpec((1, tn), lambda i, j, k: (0, j))

    bias2 = bias.reshape(1, N).astype(jnp.float32)
    if scale is not None:
        kern = functools.partial(_mm_bn_kernel, relu=relu)
        in_specs = [a_spec, b_spec, col_spec, col_spec]
        operands = (a, b, scale.reshape(1, N).astype(jnp.float32), bias2)
    else:
        kern = functools.partial(_mm_bias_kernel, relu=relu)
        in_specs = [a_spec, b_spec, col_spec]
        operands = (a, b, bias2)

    return pl.pallas_call(
        kern,
        out_shape=jax.ShapeDtypeStruct((M, N), jnp.float32),
        grid_spec=pltpu.PrefetchScalarGridSpec(
            num_scalar_prefetch=0,
            grid=(pl.cdiv(M, tm), pl.cdiv(N, tn), ksteps),
            in_specs=in_specs,
            out_specs=pl.BlockSpec((tm, tn), lambda i, j, k: (i, j)),
            scratch_shapes=[pltpu.VMEM((tm, tn), jnp.float32)]),
        compiler_params=pltpu.CompilerParams(
            dimension_semantics=("parallel", "parallel", "arbitrary"),
            vmem_limit_bytes=VMEM_LIMIT),
    )(*operands)


# ----------------------------- elementwise / pooling wrappers -----------------------------

def normalize_nchw(x, mean, std):
    """Standalone Normalize (the original nn.Module): (x - mean) / std on NCHW input.

    Lane-dense layout (N*C rows, H*W lanes) instead of a 3-wide channel lane axis,
    and multiply by a precomputed reciprocal instead of dividing.
    (Inside model2_forward this op is folded into conv1 instead of calling this.)
    """
    n, c, h, w = x.shape
    rows, lanes = n * c, h * w
    xr = x.reshape(rows, lanes).astype(jnp.float32)
    m = jnp.tile(mean.reshape(1, c).astype(jnp.float32), (n, 1)).reshape(rows, 1)
    inv = jnp.tile((1.0 / std).reshape(1, c).astype(jnp.float32), (n, 1)).reshape(rows, 1)
    br = rows if rows <= 1024 else 1024
    row_spec = pl.BlockSpec((br, lanes), lambda i: (i, 0))
    vec_spec = pl.BlockSpec((br, 1), lambda i: (i, 0))
    out = pl.pallas_call(
        _normalize_kernel,
        out_shape=jax.ShapeDtypeStruct((rows, lanes), jnp.float32),
        grid_spec=pltpu.PrefetchScalarGridSpec(
            num_scalar_prefetch=0,
            grid=(pl.cdiv(rows, br),),
            in_specs=[row_spec, vec_spec, vec_spec],
            out_specs=row_spec),
        compiler_params=pltpu.CompilerParams(dimension_semantics=("parallel",)),
    )(xr, m, inv)
    return out.reshape(n, c, h, w)


def add_relu(a, b):
    rows, c = a.shape
    target = max(8, min(512, ((1 << 20) // (4 * c)) // 8 * 8))  # ~1 MiB blocks
    br = rows if rows <= target else target
    spec = pl.BlockSpec((br, c), lambda i: (i, 0))
    return pl.pallas_call(
        _add_relu_kernel,
        out_shape=jax.ShapeDtypeStruct((rows, c), jnp.float32),
        grid_spec=pltpu.PrefetchScalarGridSpec(
            num_scalar_prefetch=0,
            grid=(pl.cdiv(rows, br),),
            in_specs=[spec, spec],
            out_specs=spec),
        compiler_params=pltpu.CompilerParams(dimension_semantics=("parallel",)),
    )(a, b)


def maxpool_3x3_s2(x):
    """3x3 / stride-2 / pad-1 max pool without stacking 9 shifted copies in HBM."""
    n, h, w, c = x.shape
    oh = (h + 2 - 3) // 2 + 1
    ow = (w + 2 - 3) // 2 + 1
    xp = jnp.pad(x, ((0, 0), (1, 1), (1, 1), (0, 0)), constant_values=-jnp.inf)
    # Four stride-2 phase views of the padded tensor (total bytes == padded tensor).
    phases = [xp[:, a::2, b::2, :] for a in (0, 1) for b in (0, 1)]
    in_specs = [pl.BlockSpec((1,) + p.shape[1:], lambda bb: (bb, 0, 0, 0))
                for p in phases]
    return pl.pallas_call(
        functools.partial(_maxpool_kernel, oh=oh, ow=ow),
        out_shape=jax.ShapeDtypeStruct((n, oh, ow, c), jnp.float32),
        grid_spec=pltpu.PrefetchScalarGridSpec(
            num_scalar_prefetch=0,
            grid=(n,),
            in_specs=in_specs,
            out_specs=pl.BlockSpec((1, oh, ow, c), lambda bb: (bb, 0, 0, 0))),
        compiler_params=pltpu.CompilerParams(dimension_semantics=("parallel",)),
    )(*phases)


def global_avgpool(x):
    n, h, w, c = x.shape
    s = h * w
    return pl.pallas_call(
        functools.partial(_avgpool_kernel, inv_s=1.0 / s),
        out_shape=jax.ShapeDtypeStruct((n, c), jnp.float32),
        grid_spec=pltpu.PrefetchScalarGridSpec(
            num_scalar_prefetch=0,
            grid=(n,),
            in_specs=[pl.BlockSpec((1, s, c), lambda b: (b, 0, 0))],
            out_specs=pl.BlockSpec((1, c), lambda b: (b, 0))),
        compiler_params=pltpu.CompilerParams(dimension_semantics=("parallel",)),
    )(x.reshape(n, s, c))


# ----------------------------- conv glue -----------------------------

def _im2col(x, kh, kw, stride, pad):
    n, h, w, c = x.shape
    if pad:
        x = jnp.pad(x, ((0, 0), (pad, pad), (pad, pad), (0, 0)))
    oh = (h + 2 * pad - kh) // stride + 1
    ow = (w + 2 * pad - kw) // stride + 1
    cols = [x[:, i:i + stride * oh:stride, j:j + stride * ow:stride, :]
            for i in range(kh) for j in range(kw)]
    return cols, (n, oh, ow)


def conv_bn(x, w, scale, bias, stride, pad, relu):
    kh, kw, ic, oc = w.shape
    cols, (n, oh, ow) = _im2col(x.astype(jnp.bfloat16), kh, kw, stride, pad)
    if len(cols) == 1:
        patches = cols[0].reshape(n * oh * ow, ic)      # 1x1 conv: no duplication
    else:
        # TODO(synk): replace this HBM patch materialization with a tap-grid BlockSpec
        #             that DMAs taps straight from the padded activation.
        patches = jnp.concatenate(cols, axis=-1).reshape(n * oh * ow, kh * kw * ic)
    out = matmul_fused(patches, w.reshape(kh * kw * ic, oc), scale, bias, relu)
    return out.reshape(n, oh, ow, oc)


# ----------------------------- ResNet-50 model -----------------------------

def bottleneck(x, p, stride):
    out = conv_bn(x, p['w1'], p['s1'], p['b1'], 1, 0, relu=True)
    out = conv_bn(out, p['w2'], p['s2'], p['b2'], stride, 1, relu=True)
    out = conv_bn(out, p['w3'], p['s3'], p['b3'], 1, 0, relu=False)
    if 'wd' in p:
        identity = conv_bn(x, p['wd'], p['sd'], p['bd'], stride, 0, relu=False)
    else:
        identity = x
    n, h, w, c = out.shape
    o = add_relu(out.reshape(n * h * w, c), identity.reshape(n * h * w, c))
    return o.reshape(n, h, w, c)


@jax.jit
def model2_forward(x_nchw, params):
    # PyTorch NCHW input -> NHWC for TPU-friendly compute.
    x = jnp.transpose(x_nchw.astype(jnp.float32), (0, 2, 3, 1))
    # Input normalization folded into conv1:
    #   * 1/std folded into conv1 weights per input channel,
    #   * "- mean" fused by XLA into conv1's im2col pad (zero-padded taps then
    #     correspond exactly to normalized zeros, preserving boundary semantics).
    x = x - params['norm_mean'].reshape(1, 1, 1, -1)
    w1 = params['conv1_w'] * (1.0 / params['norm_std']).reshape(1, 1, -1, 1)
    x = conv_bn(x, w1, params['bn1_s'], params['bn1_b'], stride=2, pad=3, relu=True)
    x = maxpool_3x3_s2(x)
    for li, (nblocks, width, stride) in enumerate(LAYERS):
        for bi in range(nblocks):
            s = stride if bi == 0 else 1
            x = bottleneck(x, params[f'layer{li}_{bi}'], s)
    pooled = global_avgpool(x)                               # (N, 2048)
    logits = matmul_fused(pooled, params['fc_w'], None, params['fc_b'], relu=False)
    return logits                                            # (N, 1000)


# ----------------------------- parameter init -----------------------------

class _KeyGen:
    def __init__(self, key):
        self.key = key

    def __call__(self):
        self.key, sub = jax.random.split(self.key)
        return sub


def _conv_w(kg, kh, kw, ic, oc):
    fan_in = kh * kw * ic
    return jax.random.normal(kg(), (kh, kw, ic, oc), jnp.float32) * math.sqrt(2.0 / fan_in)


def _bn(kg, c):
    scale = 1.0 + 0.1 * jax.random.normal(kg(), (c,), jnp.float32)
    bias = 0.1 * jax.random.normal(kg(), (c,), jnp.float32)
    return scale, bias


def _bottleneck_params(kg, in_c, width, stride):
    p = {}
    p['w1'] = _conv_w(kg, 1, 1, in_c, width)
    p['s1'], p['b1'] = _bn(kg, width)
    p['w2'] = _conv_w(kg, 3, 3, width, width)
    p['s2'], p['b2'] = _bn(kg, width)
    p['w3'] = _conv_w(kg, 1, 1, width, width * 4)
    p['s3'], p['b3'] = _bn(kg, width * 4)
    if stride != 1 or in_c != width * 4:
        p['wd'] = _conv_w(kg, 1, 1, in_c, width * 4)
        p['sd'], p['bd'] = _bn(kg, width * 4)
    return p


def init_model2_params(key):
    kg = _KeyGen(key)
    params = {
        'norm_mean': jnp.array([0.485, 0.456, 0.406], jnp.float32),
        'norm_std': jnp.array([0.229, 0.224, 0.225], jnp.float32),
        'conv1_w': _conv_w(kg, 7, 7, 3, 64),
    }
    params['bn1_s'], params['bn1_b'] = _bn(kg, 64)
    in_c = 64
    for li, (nblocks, width, stride) in enumerate(LAYERS):
        for bi in range(nblocks):
            s = stride if bi == 0 else 1
            params[f'layer{li}_{bi}'] = _bottleneck_params(kg, in_c, width, s)
            in_c = width * 4
    params['fc_w'] = jax.random.normal(kg(), (2048, 1000), jnp.float32) * math.sqrt(1.0 / 2048)
    params['fc_b'] = 0.01 * jax.random.normal(kg(), (1000,), jnp.float32)
    return params


# ----------------------------- main -----------------------------

if __name__ == "__main__":
    key = jax.random.PRNGKey(0)
    k_params, k_input = jax.random.split(key)
    params = init_model2_params(k_params)
    # Small ImageNet-style input: batch=2, 3 channels, 32x32 spatial (NCHW).
    x = jax.random.uniform(k_input, (2, 3, 32, 32), jnp.float32)

    # Standalone Normalize kernel (the original nn.Module), checked against reference.
    y = normalize_nchw(x, params['norm_mean'], params['norm_std'])
    y_ref = (x - params['norm_mean'].reshape(1, 3, 1, 1)) / params['norm_std'].reshape(1, 3, 1, 1)
    y = jax.block_until_ready(y)
    assert bool(jnp.allclose(y, y_ref, atol=1e-5, rtol=1e-5))

    # Full Model2 forward (normalization folded into conv1).
    logits = model2_forward(x, params)
    logits = jax.block_until_ready(logits)
    assert logits.shape == (2, 1000), logits.shape
    assert bool(jnp.all(jnp.isfinite(logits)))
    print("KERNEL_OK")
</pallas_src>

<mosaic_0001>
module attributes {stable_mosaic.version = 11 : i64} {
  func.func @_normalize_kernel(%arg0: i32, %arg1: memref<6x1024xf32, #tpu.memory_space<vmem>>, %arg2: memref<6x1xf32, #tpu.memory_space<vmem>>, %arg3: memref<6x1xf32, #tpu.memory_space<vmem>>, %arg4: memref<6x1024xf32, #tpu.memory_space<vmem>>) attributes {dimension_semantics = [#tpu.dimension_semantics<parallel>], iteration_bounds = array<i64: 1>, scalar_prefetch = 0 : i64, scratch_operands = 0 : i64, tpu.core_type = #tpu.core_type<tc>, window_params = [{transform_indices = @transform_0, window_bounds = array<i64: 6, 1024>}, {transform_indices = @transform_1, window_bounds = array<i64: 6, 1>}, {transform_indices = @transform_2, window_bounds = array<i64: 6, 1>}, {transform_indices = @transform_3, window_bounds = array<i64: 6, 1024>}]} {
    %c0 = arith.constant 0 : index
    %c0_0 = arith.constant 0 : index
    %0 = vector.load %arg1[%c0, %c0_0] : memref<6x1024xf32, #tpu.memory_space<vmem>>, vector<6x1024xf32>
    %c0_1 = arith.constant 0 : index
    %c0_2 = arith.constant 0 : index
    %1 = vector.load %arg2[%c0_1, %c0_2] : memref<6x1xf32, #tpu.memory_space<vmem>>, vector<6x1xf32>
    %2 = vector.broadcast %1 : vector<6x1xf32> to vector<6x1024xf32>
    %3 = arith.subf %0, %2 : vector<6x1024xf32>
    %c0_3 = arith.constant 0 : index
    %c0_4 = arith.constant 0 : index
    %4 = vector.load %arg3[%c0_3, %c0_4] : memref<6x1xf32, #tpu.memory_space<vmem>>, vector<6x1xf32>
    %5 = vector.broadcast %4 : vector<6x1xf32> to vector<6x1024xf32>
    %6 = arith.mulf %3, %5 : vector<6x1024xf32>
    %c0_5 = arith.constant 0 : index
    %c0_6 = arith.constant 0 : index
    %7 = vector.load %arg4[%c0_5, %c0_6] : memref<6x1024xf32, #tpu.memory_space<vmem>>, vector<6x1024xf32>
    tpu.vector_store %arg4[%c0_5, %c0_6], %6 {strides = array<i32>} : memref<6x1024xf32, #tpu.memory_space<vmem>>, vector<6x1024xf32>,
    return
  }
  func.func @transform_0(%arg0: i32) -> (i32, i32) {
    %c0_i32 = arith.constant 0 : i32
    %c0_i32_0 = arith.constant 0 : i32
    return %arg0, %c0_i32 : i32, i32
  }
  func.func @transform_1(%arg0: i32) -> (i32, i32) {
    %c0_i32 = arith.constant 0 : i32
    %c0_i32_0 = arith.constant 0 : i32
    return %arg0, %c0_i32 : i32, i32
  }
  func.func @transform_2(%arg0: i32) -> (i32, i32) {
    %c0_i32 = arith.constant 0 : i32
    %c0_i32_0 = arith.constant 0 : i32
    return %arg0, %c0_i32 : i32, i32
  }
  func.func @transform_3(%arg0: i32) -> (i32, i32) {
    %c0_i32 = arith.constant 0 : i32
    %c0_i32_0 = arith.constant 0 : i32
    return %arg0, %c0_i32 : i32, i32
  }
}

</mosaic_0001>

<llo_original>
// kernel: tpu_custom_call.1
$region0: #{tpu_custom_call.1}
  #allocation0 [shape = 'u32[]', space=smem, size = 0x4, offset = 0x4, fixed_abs, tag = 'smem constant byte address 0x4 - core index']
  #allocation1 [shape = 'u32[144,128]{1,0:T(1,128)}', space=vmem, size = 0x12000, scoped, tag = 'internal scratch']
  %s0 = inlined_call_operand.hbm [shape: f32[6,1024], index: 0, kind: input, shape index: {}]
  %s1 = inlined_call_operand.vmem [shape: f32[6,1], index: 1, kind: input, shape index: {}]
  %s2 = inlined_call_operand.vmem [shape: f32[6,1], index: 2, kind: input, shape index: {}]
  %s3 = inlined_call_operand.hbm [shape: f32[6,1024], index: 3, kind: output, shape index: {}]
  %s4 = sld [smem:[#allocation0]]
  $region26: #{tpu_custom_call.1} parent=0
    _
  %s6 = ssub.s32 1, %s4
  %s7 = scalar_select 0, %s6, %s4
  $region1: #{tpu_custom_call.1} parent=0
    #allocation2 [shape = 'u8[32768]{0}', space=vmem, size = 0x8000, scoped, tag = 'input window, operand 0, single buffered']
    #allocation3 [shape = 's32[1]{0}', space=sflag, size = 0x4, scoped, tag = 'scoped memory for tpu_custom_call.1']
    #allocation4 [shape = 's32[1]{0}', space=sflag, size = 0x4, scoped, tag = 'scoped memory for tpu_custom_call.1']
    #allocation5 [shape = 'u8[32768]{0}', space=vmem, size = 0x8000, scoped, tag = 'output window, operand 0, single buffered']
    %8 = vsyncpa [#allocation3], 0
    %9 = vsyncpa [#allocation4], 0
    // Predicated region
    $region2: #{tpu_custom_call.1} parent=1 // pred_check
      _
    $region3: #{tpu_custom_call.1} parent=1 // pred_check_branch
      %11 = sbr.rel (0) target = $region5
    $region4: #{tpu_custom_call.1} parent=1 // pred_region
      %s13 = ssub.s32 1024, 1024
      %14 = vsyncadd [#allocation3], %s13
      %s16 = sshll.u32 [#allocation2], 4
      %s17 = int_to_ptr.vmem [resolvable:$true] %s16
      %19 = dma.hbm_to_vmem [thread:$0]  %s0, 1024, %s17, [#allocation3]
    $region5: #{tpu_custom_call.1} parent=1 // pred_fallthru
      _
    // Predicated region
    $region6: #{tpu_custom_call.1} parent=1 // pred_check
      _
    $region7: #{tpu_custom_call.1} parent=1 // pred_check_branch
      %21 = sbr.rel (0) target = $region9
    $region8: #{tpu_custom_call.1} parent=1 // pred_region
      _
    $region9: #{tpu_custom_call.1} parent=1 // pred_fallthru
      _
    // Predicated region
    $region10: #{tpu_custom_call.1} parent=1 // pred_check
      _
    $region11: #{tpu_custom_call.1} parent=1 // pred_check_branch
      %23 = sbr.rel (0) target = $region13
    $region12: #{tpu_custom_call.1} parent=1 // pred_region
      _
    $region13: #{tpu_custom_call.1} parent=1 // pred_fallthru
      _
    // Predicated region
    $region14: #{tpu_custom_call.1} parent=1 // pred_check
      _
    $region15: #{tpu_custom_call.1} parent=1 // pred_check_branch
      %25 = sbr.rel (0) target = $region17
    $region16: #{tpu_custom_call.1} parent=1 // pred_region
      %26 = dma.done [#allocation3], 1024
    $region17: #{tpu_custom_call.1} parent=1 // pred_fallthru
      _
    %v27 = vld [vmem:[#allocation2] sm:$0x3f]
    %v28 = vld [vmem:[#allocation2 + $0x8] sm:$0x3f]
    %v29 = vld [vmem:[#allocation2 + $0x10] sm:$0x3f]
    %v30 = vld [vmem:[#allocation2 + $0x18] sm:$0x3f]
    %v31 = vld [vmem:[#allocation2 + $0x20] sm:$0x3f]
    %v32 = vld [vmem:[#allocation2 + $0x28] sm:$0x3f]
    %v33 = vld [vmem:[#allocation2 + $0x30] sm:$0x3f]
    %v34 = vld [vmem:[#allocation2 + $0x38] sm:$0x3f]
    %v35 = vld [vmem:[%s1] sm:$0x3f]
    %37 = vset.pattern.permute.xlu0 0
    %38 = vperm.xlu0 %37, %v35
    %v39 = vpop.permute.xlu0 %38
    %v41 = vsub.f32 %v27, %v39
    %v42 = vsub.f32 %v28, %v39
    %v43 = vsub.f32 %v29, %v39
    %v44 = vsub.f32 %v30, %v39
    %v45 = vsub.f32 %v31, %v39
    %v46 = vsub.f32 %v32, %v39
    %v47 = vsub.f32 %v33, %v39
    %v48 = vsub.f32 %v34, %v39
    %v49 = vld [vmem:[%s2] sm:$0x3f]
    %51 = vset.pattern.permute.xlu0 0
    %52 = vperm.xlu0 %51, %v49
    %v53 = vpop.permute.xlu0 %52
    %v55 = vmul.f32 %v41, %v53
    %v56 = vmul.f32 %v42, %v53
    %v57 = vmul.f32 %v43, %v53
    %v58 = vmul.f32 %v44, %v53
    %v59 = vmul.f32 %v45, %v53
    %v60 = vmul.f32 %v46, %v53
    %v61 = vmul.f32 %v47, %v53
    %v62 = vmul.f32 %v48, %v53
    %63 = vst [vmem:[#allocation5] sm:$0x3f] %v55
    %64 = vst [vmem:[#allocation5 + $0x8] sm:$0x3f] %v56
    %65 = vst [vmem:[#allocation5 + $0x10] sm:$0x3f] %v57
    %66 = vst [vmem:[#allocation5 + $0x18] sm:$0x3f] %v58
    %67 = vst [vmem:[#allocation5 + $0x20] sm:$0x3f] %v59
    %68 = vst [vmem:[#allocation5 + $0x28] sm:$0x3f] %v60
    %69 = vst [vmem:[#allocation5 + $0x30] sm:$0x3f] %v61
    %70 = vst [vmem:[#allocation5 + $0x38] sm:$0x3f] %v62
    // Predicated region
    $region18: #{tpu_custom_call.1} parent=1 // pred_check
      _
    $region19: #{tpu_custom_call.1} parent=1 // pred_check_branch
      %72 = sbr.rel (0) target = $region21
    $region20: #{tpu_custom_call.1} parent=1 // pred_region
      %s74 = ssub.s32 1024, 1024
      %75 = vsyncadd [#allocation4], %s74
      %s77 = sshll.u32 [#allocation5], 4
      %s78 = int_to_ptr.vmem [resolvable:$true] %s77
      %80 = dma.vmem_to_hbm [thread:$0]  %s78, 1024, %s3, [#allocation4]
    $region21: #{tpu_custom_call.1} parent=1 // pred_fallthru
      _
    // Predicated region
    $region22: #{tpu_custom_call.1} parent=1 // pred_check
      _
    $region23: #{tpu_custom_call.1} parent=1 // pred_check_branch
      %82 = sbr.rel (0) target = $region25
    $region24: #{tpu_custom_call.1} parent=1 // pred_region
      %83 = dma.done [#allocation4], 1024
    $region25: #{tpu_custom_call.1} parent=1 // pred_fallthru
      _
    %84 = vsyncpa [#allocation3], 1
    %85 = vsyncpa [#allocation4], 1

</llo_original>
